<compile_context>
chip_gen: v7x
topology: tpu7x:2x2x1
jax: 0.10.0
libtpu: 0.0.40
codegen_flags: <defaults>
</compile_context>

<pallas_src>
import jax
import jax.numpy as jnp
from typing import NamedTuple
from jax.experimental import pallas as pl
from jax.experimental.pallas import tpu as pltpu


def _round_up(x, m):
    return ((x + m - 1) // m) * m


def _cdiv(a, b):
    return (a + b - 1) // b


class PreparedParams(NamedTuple):
    w1c: jax.Array   # (2*state_dim, H0)  frameskip+concat folded, compute dtype
    b1: jax.Array    # (1, H0)            f32
    w2: jax.Array    # (H0, H1)           compute dtype
    b2: jax.Array    # (1, H1)            f32
    w3p: jax.Array   # (H1, Np)           lane-padded, compute dtype
    b3p: jax.Array   # (1, Np)            lane-padded, f32
    action_dim: int


def _inv_dyn_kernel(z_ref, w1_ref, b1_ref, w2_ref, b2_ref, w3_ref, b3_ref, out_ref):
    wdt = w1_ref.dtype                      # MXU operand dtype (bf16 or f32)

    # softsign on the host-concatenated [state, next_state] tile (elementwise, so
    # it commutes with the concat); frameskip / difference are folded into w1c.
    z = z_ref[...].astype(jnp.float32)
    z = z / (1.0 + jnp.abs(z))

    # Layer 1 (single fused matmul) + ReLU, f32 accumulation on the MXU.
    h1 = jnp.dot(z.astype(wdt), w1_ref[...], preferred_element_type=jnp.float32)
    h1 = jnp.maximum(h1 + b1_ref[...].astype(jnp.float32), 0.0)

    # Layer 2 + ReLU.
    h2 = jnp.dot(h1.astype(wdt), w2_ref[...], preferred_element_type=jnp.float32)
    h2 = jnp.maximum(h2 + b2_ref[...].astype(jnp.float32), 0.0)

    # Layer 3 + tanh; store in the (lane-padded) output dtype.
    o = jnp.dot(h2.astype(wdt), w3_ref[...], preferred_element_type=jnp.float32)
    o = o + b3_ref[...].astype(jnp.float32)
    out_ref[...] = jnp.tanh(o).astype(out_ref.dtype)


def prepare_params(params, frameskip, state_dim, compute_dtype=jnp.bfloat16):
    """One-time host-side prep: fold frameskip+concat into layer 1, lane-pad layer 3.

    The fold is done in f32 and cast to `compute_dtype` at the end (avoids bf16
    double-rounding). Biases stay in f32 (added after the f32 accumulation).
    """
    w1, b1, w2, b2, w3, b3 = params
    H1, action_dim = w3.shape

    w1f = w1.astype(jnp.float32)
    A = w1f[:state_dim, :]               # rows that multiplied state_d
    Bm = w1f[state_dim:, :]              # rows that multiplied next_state
    inv_fs = 1.0 / float(frameskip)
    # h1 = sd@A + ns@Bm = softsign(state)@(-A/fs) + softsign(next_state)@(A/fs + Bm)
    w1c = jnp.concatenate([-A * inv_fs, A * inv_fs + Bm], axis=0).astype(compute_dtype)

    Np = _round_up(max(action_dim, 128), 128)
    w3p = jnp.zeros((H1, Np), compute_dtype).at[:, :action_dim].set(
        w3.astype(compute_dtype))
    b3p = jnp.zeros((1, Np), jnp.float32).at[:, :action_dim].set(
        b3.astype(jnp.float32).reshape(1, action_dim))

    return PreparedParams(
        w1c=w1c,
        b1=b1.astype(jnp.float32).reshape(1, -1),
        w2=w2.astype(compute_dtype),
        b2=b2.astype(jnp.float32).reshape(1, -1),
        w3p=w3p,
        b3p=b3p,
        action_dim=int(action_dim),
    )


def inverse_dynamics_forward(state, next_state, prepared, *, block_rows=1024):
    """Forward pass. state/next_state: [B, state_dim] (f32); prepared: PreparedParams.

    block_rows guidance:
      v6e : 1024-2048 (32 MiB default scoped VMEM)
      v7x : choose so the grid has >=2 batch tiles (2 TensorCores); 64 MiB VMEM total
      v5e : <=1024 (16 MiB default scoped VMEM) unless vmem_limit_bytes is raised
    """
    w1c, b1, w2, b2, w3p, b3p, action_dim = prepared
    B, _ = state.shape
    Din, H0 = w1c.shape
    H1 = w2.shape[1]
    Np = w3p.shape[1]
    out_dtype = w1c.dtype

    # Host-side concat of the RAW inputs (softsign commutes with the concat).
    z = jnp.concatenate([state, next_state], axis=1).astype(jnp.float32)

    # Balanced batch tiling: n_tiles tiles of TB rows (TB multiple of 8 sublanes),
    # minimal padding instead of rounding B up to a multiple of block_rows.
    n_tiles = max(1, _cdiv(B, block_rows))
    TB = _round_up(_cdiv(B, n_tiles), 8)
    Bp = n_tiles * TB
    if Bp != B:
        z = jnp.pad(z, ((0, Bp - B), (0, 0)))

    w_itemsize = jnp.dtype(w1c.dtype).itemsize
    cost = pl.CostEstimate(
        flops=2 * Bp * (Din * H0 + H0 * H1 + H1 * Np),
        transcendentals=Bp * (Din + Np),          # softsign reciprocals + tanh
        bytes_accessed=(z.size * 4
                        + (w1c.size + w2.size + w3p.size) * w_itemsize
                        + (b1.size + b2.size + b3p.size) * 4
                        + Bp * Np * jnp.dtype(out_dtype).itemsize),
    )

    def resident(shape):
        # Same block at every grid step -> stays resident in VMEM (no re-DMA).
        return pl.BlockSpec(shape, lambda i: (0, 0))

    out = pl.pallas_call(
        _inv_dyn_kernel,
        out_shape=jax.ShapeDtypeStruct((Bp, Np), out_dtype),
        grid=(n_tiles,),
        in_specs=[
            pl.BlockSpec((TB, Din), lambda i: (i, 0)),       # fused [state|next_state] tile
            resident((Din, H0)), resident((1, H0)),          # w1c (folded), b1
            resident((H0, H1)), resident((1, H1)),           # w2, b2
            resident((H1, Np)), resident((1, Np)),           # w3 (lane-padded), b3
        ],
        out_specs=pl.BlockSpec((TB, Np), lambda i: (i, 0)),
        compiler_params=pltpu.CompilerParams(
            dimension_semantics=("parallel",)),              # v7x: batch tiles across 2 TCs
        cost_estimate=cost,
    )(z, w1c, b1, w2, b2, w3p, b3p)

    return out[:B, :action_dim]


def init_params(key, state_dim, action_dim, hidden_dim=(512, 512)):
    """Deterministic synthetic f32 master parameters ([in, out] layout per nn.Linear)."""
    k1, k2, k3, k4, k5, k6 = jax.random.split(key, 6)
    in0 = state_dim * 2
    w1 = jax.random.normal(k1, (in0, hidden_dim[0]), jnp.float32) * 0.05
    b1 = jax.random.normal(k2, (1, hidden_dim[0]), jnp.float32) * 0.01
    w2 = jax.random.normal(k3, (hidden_dim[0], hidden_dim[1]), jnp.float32) * 0.05
    b2 = jax.random.normal(k4, (1, hidden_dim[1]), jnp.float32) * 0.01
    w3 = jax.random.normal(k5, (hidden_dim[1], action_dim), jnp.float32) * 0.05
    b3 = jax.random.normal(k6, (1, action_dim), jnp.float32) * 0.01
    return (w1, b1, w2, b2, w3, b3)


def reference_forward(state, next_state, params, frameskip):
    """Pure-JAX reference matching the PyTorch forward (train=True, DNN branch)."""
    w1, b1, w2, b2, w3, b3 = (p.astype(jnp.float32) for p in params)
    s = state / (1.0 + jnp.abs(state))
    ns = next_state / (1.0 + jnp.abs(next_state))
    sd = (ns - s) / frameskip
    z = jnp.concatenate([sd, ns], axis=1)
    h1 = jnp.maximum(z @ w1 + b1, 0.0)
    h2 = jnp.maximum(h1 @ w2 + b2, 0.0)
    return jnp.tanh(h2 @ w3 + b3)


if __name__ == "__main__":
    key = jax.random.PRNGKey(0)
    k_s, k_ns, k_p = jax.random.split(key, 3)

    batch = 8
    state_dim = 16
    action_dim = 4
    frameskip = 4.0

    state = jax.random.normal(k_s, (batch, state_dim), jnp.float32)
    next_state = jax.random.normal(k_ns, (batch, state_dim), jnp.float32)
    params = init_params(k_p, state_dim, action_dim, hidden_dim=(512, 512))
    ref = reference_forward(state, next_state, params, frameskip)

    # Exact-precision f32 path (semantics check against the PyTorch-equivalent reference).
    prep_f32 = prepare_params(params, frameskip, state_dim, compute_dtype=jnp.float32)
    out_f32 = jax.block_until_ready(
        inverse_dynamics_forward(state, next_state, prep_f32))
    assert out_f32.shape == (batch, action_dim)
    assert out_f32.dtype == jnp.float32
    assert jnp.allclose(out_f32, ref, atol=1e-4, rtol=1e-4), \
        float(jnp.max(jnp.abs(out_f32 - ref)))

    # Production path: bf16 MXU operands + bf16 lane-padded output, f32 accumulation.
    prep_bf16 = prepare_params(params, frameskip, state_dim)   # default bf16
    out_bf16 = jax.block_until_ready(
        inverse_dynamics_forward(state, next_state, prep_bf16))
    assert out_bf16.shape == (batch, action_dim)
    assert out_bf16.dtype == jnp.bfloat16
    assert jnp.allclose(out_bf16.astype(jnp.float32), ref, atol=5e-2, rtol=5e-2)

    print("KERNEL_OK")
</pallas_src>

<mosaic_0001>
module attributes {stable_mosaic.version = 11 : i64} {
  func.func @_inv_dyn_kernel(%arg0: i32, %arg1: memref<8x32xf32, #tpu.memory_space<vmem>>, %arg2: memref<32x512xf32, #tpu.memory_space<vmem>>, %arg3: memref<1x512xf32, #tpu.memory_space<vmem>>, %arg4: memref<512x512xf32, #tpu.memory_space<vmem>>, %arg5: memref<1x512xf32, #tpu.memory_space<vmem>>, %arg6: memref<512x128xf32, #tpu.memory_space<vmem>>, %arg7: memref<1x128xf32, #tpu.memory_space<vmem>>, %arg8: memref<8x128xf32, #tpu.memory_space<vmem>>) attributes {dimension_semantics = [#tpu.dimension_semantics<parallel>], iteration_bounds = array<i64: 1>, scalar_prefetch = 0 : i64, scratch_operands = 0 : i64, tpu.core_type = #tpu.core_type<tc>, window_params = [{transform_indices = @transform_0, window_bounds = array<i64: 8, 32>}, {pipeline_mode = #tpu.pipeline_mode<synchronous>, transform_indices = @transform_1, window_bounds = array<i64: 32, 512>}, {pipeline_mode = #tpu.pipeline_mode<synchronous>, transform_indices = @transform_2, window_bounds = array<i64: 1, 512>}, {pipeline_mode = #tpu.pipeline_mode<synchronous>, transform_indices = @transform_3, window_bounds = array<i64: 512, 512>}, {pipeline_mode = #tpu.pipeline_mode<synchronous>, transform_indices = @transform_4, window_bounds = array<i64: 1, 512>}, {pipeline_mode = #tpu.pipeline_mode<synchronous>, transform_indices = @transform_5, window_bounds = array<i64: 512, 128>}, {pipeline_mode = #tpu.pipeline_mode<synchronous>, transform_indices = @transform_6, window_bounds = array<i64: 1, 128>}, {transform_indices = @transform_7, window_bounds = array<i64: 8, 128>}]} {
    %c0 = arith.constant 0 : index
    %c0_0 = arith.constant 0 : index
    %0 = vector.load %arg1[%c0, %c0_0] : memref<8x32xf32, #tpu.memory_space<vmem>>, vector<8x32xf32>
    %1 = math.absf %0 : vector<8x32xf32>
    %cst = arith.constant 1.000000e+00 : f32
    %2 = vector.broadcast %cst : f32 to vector<8x32xf32>
    %3 = arith.addf %2, %1 : vector<8x32xf32>
    %4 = arith.divf %0, %3 : vector<8x32xf32>
    %c0_1 = arith.constant 0 : index
    %c0_2 = arith.constant 0 : index
    %5 = vector.load %arg2[%c0_1, %c0_2] : memref<32x512xf32, #tpu.memory_space<vmem>>, vector<32x512xf32>
    %cst_3 = arith.constant dense<0.000000e+00> : vector<8x512xf32>
    %6 = tpu.matmul %4, %5, %cst_3 {dimension_numbers = #tpu.dot_dimension_numbers<[1], [0], [0], [1], [0, 0, 1, 1], [], []>} : vector<8x32xf32>, vector<32x512xf32>, vector<8x512xf32> -> vector<8x512xf32>
    %c0_4 = arith.constant 0 : index
    %c0_5 = arith.constant 0 : index
    %7 = vector.load %arg3[%c0_4, %c0_5] : memref<1x512xf32, #tpu.memory_space<vmem>>, vector<1x512xf32>
    %8 = vector.broadcast %7 : vector<1x512xf32> to vector<8x512xf32>
    %9 = arith.addf %6, %8 : vector<8x512xf32>
    %cst_6 = arith.constant 0.000000e+00 : f32
    %10 = vector.broadcast %cst_6 : f32 to vector<8x512xf32>
    %11 = arith.maximumf %9, %10 : vector<8x512xf32>
    %c0_7 = arith.constant 0 : index
    %c0_8 = arith.constant 0 : index
    %12 = vector.load %arg4[%c0_7, %c0_8] : memref<512x512xf32, #tpu.memory_space<vmem>>, vector<512x512xf32>
    %cst_9 = arith.constant dense<0.000000e+00> : vector<8x512xf32>
    %13 = tpu.matmul %11, %12, %cst_9 {dimension_numbers = #tpu.dot_dimension_numbers<[1], [0], [0], [1], [0, 0, 1, 1], [], []>} : vector<8x512xf32>, vector<512x512xf32>, vector<8x512xf32> -> vector<8x512xf32>
    %c0_10 = arith.constant 0 : index
    %c0_11 = arith.constant 0 : index
    %14 = vector.load %arg5[%c0_10, %c0_11] : memref<1x512xf32, #tpu.memory_space<vmem>>, vector<1x512xf32>
    %15 = vector.broadcast %14 : vector<1x512xf32> to vector<8x512xf32>
    %16 = arith.addf %13, %15 : vector<8x512xf32>
    %cst_12 = arith.constant 0.000000e+00 : f32
    %17 = vector.broadcast %cst_12 : f32 to vector<8x512xf32>
    %18 = arith.maximumf %16, %17 : vector<8x512xf32>
    %c0_13 = arith.constant 0 : index
    %c0_14 = arith.constant 0 : index
    %19 = vector.load %arg6[%c0_13, %c0_14] : memref<512x128xf32, #tpu.memory_space<vmem>>, vector<512x128xf32>
    %cst_15 = arith.constant dense<0.000000e+00> : vector<8x128xf32>
    %20 = tpu.matmul %18, %19, %cst_15 {dimension_numbers = #tpu.dot_dimension_numbers<[1], [0], [0], [1], [0, 0, 1, 1], [], []>} : vector<8x512xf32>, vector<512x128xf32>, vector<8x128xf32> -> vector<8x128xf32>
    %c0_16 = arith.constant 0 : index
    %c0_17 = arith.constant 0 : index
    %21 = vector.load %arg7[%c0_16, %c0_17] : memref<1x128xf32, #tpu.memory_space<vmem>>, vector<1x128xf32>
    %22 = vector.broadcast %21 : vector<1x128xf32> to vector<8x128xf32>
    %23 = arith.addf %20, %22 : vector<8x128xf32>
    %24 = math.tanh %23 : vector<8x128xf32>
    %c0_18 = arith.constant 0 : index
    %c0_19 = arith.constant 0 : index
    %25 = vector.load %arg8[%c0_18, %c0_19] : memref<8x128xf32, #tpu.memory_space<vmem>>, vector<8x128xf32>
    tpu.vector_store %arg8[%c0_18, %c0_19], %24 {strides = array<i32>} : memref<8x128xf32, #tpu.memory_space<vmem>>, vector<8x128xf32>,
    return
  }
  func.func @transform_0(%arg0: i32) -> (i32, i32) {
    %c0_i32 = arith.constant 0 : i32
    %c0_i32_0 = arith.constant 0 : i32
    return %arg0, %c0_i32 : i32, i32
  }
  func.func @transform_1(%arg0: i32) -> (i32, i32) {
    %c0_i32 = arith.constant 0 : i32
    %c0_i32_0 = arith.constant 0 : i32
    %c0_i32_1 = arith.constant 0 : i32
    return %c0_i32, %c0_i32_0 : i32, i32
  }
  func.func @transform_2(%arg0: i32) -> (i32, i32) {
    %c0_i32 = arith.constant 0 : i32
    %c0_i32_0 = arith.constant 0 : i32
    %c0_i32_1 = arith.constant 0 : i32
    return %c0_i32, %c0_i32_0 : i32, i32
  }
  func.func @transform_3(%arg0: i32) -> (i32, i32) {
    %c0_i32 = arith.constant 0 : i32
    %c0_i32_0 = arith.constant 0 : i32
    %c0_i32_1 = arith.constant 0 : i32
    return %c0_i32, %c0_i32_0 : i32, i32
  }
  func.func @transform_4(%arg0: i32) -> (i32, i32) {
    %c0_i32 = arith.constant 0 : i32
    %c0_i32_0 = arith.constant 0 : i32
    %c0_i32_1 = arith.constant 0 : i32
    return %c0_i32, %c0_i32_0 : i32, i32
  }
  func.func @transform_5(%arg0: i32) -> (i32, i32) {
    %c0_i32 = arith.constant 0 : i32
    %c0_i32_0 = arith.constant 0 : i32
    %c0_i32_1 = arith.constant 0 : i32
    return %c0_i32, %c0_i32_0 : i32, i32
  }
  func.func @transform_6(%arg0: i32) -> (i32, i32) {
    %c0_i32 = arith.constant 0 : i32
    %c0_i32_0 = arith.constant 0 : i32
    %c0_i32_1 = arith.constant 0 : i32
    return %c0_i32, %c0_i32_0 : i32, i32
  }
  func.func @transform_7(%arg0: i32) -> (i32, i32) {
    %c0_i32 = arith.constant 0 : i32
    %c0_i32_0 = arith.constant 0 : i32
    return %arg0, %c0_i32 : i32, i32
  }
}

</mosaic_0001>

<llo_original>
// kernel: tpu_custom_call.1
$region0: #{tpu_custom_call.1}
  #allocation0 [shape = 'u32[]', space=smem, size = 0x4, offset = 0x4, fixed_abs, tag = 'smem constant byte address 0x4 - core index']
  #allocation1 [shape = 'u32[144,128]{1,0:T(1,128)}', space=vmem, size = 0x12000, scoped, tag = 'internal scratch']
  %s0 = inlined_call_operand.hbm [shape: f32[8,32], index: 0, kind: input, shape index: {}]
  %s1 = inlined_call_operand.hbm [shape: f32[32,512], index: 1, kind: input, shape index: {}]
  %s2 = inlined_call_operand.vmem [shape: f32[1,512], index: 2, kind: input, shape index: {}]
  %s3 = inlined_call_operand.hbm [shape: f32[512,512], index: 3, kind: input, shape index: {}]
  %s4 = inlined_call_operand.vmem [shape: f32[1,512], index: 4, kind: input, shape index: {}]
  %s5 = inlined_call_operand.hbm [shape: f32[512,128], index: 5, kind: input, shape index: {}]
  %s6 = inlined_call_operand.vmem [shape: f32[1,128], index: 6, kind: input, shape index: {}]
  %s7 = inlined_call_operand.hbm [shape: f32[8,128], index: 7, kind: output, shape index: {}]
  %s8 = sld [smem:[#allocation0]]
  $region54: #{tpu_custom_call.1} parent=0
    _
  %s10 = ssub.s32 1, %s8
  %s11 = scalar_select 0, %s10, %s8
  $region1: #{tpu_custom_call.1} parent=0
    #allocation2 [shape = 'u8[4096]{0}', space=vmem, size = 0x1000, scoped, tag = 'input window, operand 0, single buffered']
    #allocation3 [shape = 's32[1]{0}', space=sflag, size = 0x4, scoped, tag = 'scoped memory for tpu_custom_call.1']
    #allocation4 [shape = 's32[1]{0}', space=sflag, size = 0x4, scoped, tag = 'scoped memory for tpu_custom_call.1']
    #allocation5 [shape = 'u8[65536]{0}', space=vmem, size = 0x10000, scoped, tag = 'input window, operand 1, single buffered']
    #allocation6 [shape = 's32[1]{0}', space=sflag, size = 0x4, scoped, tag = 'scoped memory for tpu_custom_call.1']
    #allocation7 [shape = 'u8[1048576]{0}', space=vmem, size = 0x100000, scoped, tag = 'input window, operand 3, single buffered']
    #allocation8 [shape = 'u8[262144]{0}', space=vmem, size = 0x40000, scoped, tag = 'input window, operand 5, single buffered']
    #allocation9 [shape = 's32[1]{0}', space=sflag, size = 0x4, scoped, tag = 'scoped memory for tpu_custom_call.1']
    #allocation10 [shape = 'u8[4096]{0}', space=vmem, size = 0x1000, scoped, tag = 'output window, operand 0, single buffered']
    %12 = vsyncpa [#allocation3], 0
    %13 = vsyncpa [#allocation6], 0
    %14 = vsyncpa [#allocation9], 0
    %15 = vsyncpa [#allocation4], 0
    // Predicated region
    $region2: #{tpu_custom_call.1} parent=1 // pred_check
      _
    $region3: #{tpu_custom_call.1} parent=1 // pred_check_branch
      %17 = sbr.rel (0) target = $region5
    $region4: #{tpu_custom_call.1} parent=1 // pred_region
      %s19 = ssub.s32 128, 128
      %20 = vsyncadd [#allocation3], %s19
      %s22 = sshll.u32 [#allocation2], 4
      %s23 = int_to_ptr.vmem [resolvable:$true] %s22
      %25 = dma.hbm_to_vmem [thread:$0]  %s0, 128, %s23, [#allocation3]
    $region5: #{tpu_custom_call.1} parent=1 // pred_fallthru
      _
    // Predicated region
    $region6: #{tpu_custom_call.1} parent=1 // pred_check
      _
    $region7: #{tpu_custom_call.1} parent=1 // pred_check_branch
      %27 = sbr.rel (0) target = $region9
    $region8: #{tpu_custom_call.1} parent=1 // pred_region
      %s29 = ssub.s32 2048, 2048
      %30 = vsyncadd [#allocation6], %s29
      %s31 = sshll.u32 [#allocation5], 4
      %s32 = int_to_ptr.vmem [resolvable:$true] %s31
      %37 = dma.hbm_to_vmem [thread:$0]  %s1, 2048, %s32, [#allocation6], 512, 512, 32
    $region9: #{tpu_custom_call.1} parent=1 // pred_fallthru
      _
    // Predicated region
    $region10: #{tpu_custom_call.1} parent=1 // pred_check
      _
    $region11: #{tpu_custom_call.1} parent=1 // pred_check_branch
      %39 = sbr.rel (0) target = $region13
    $region12: #{tpu_custom_call.1} parent=1 // pred_region
      _
    $region13: #{tpu_custom_call.1} parent=1 // pred_fallthru
      _
    // Predicated region
    $region14: #{tpu_custom_call.1} parent=1 // pred_check
      _
    $region15: #{tpu_custom_call.1} parent=1 // pred_check_branch
      %41 = sbr.rel (0) target = $region17
    $region16: #{tpu_custom_call.1} parent=1 // pred_region
      %s43 = ssub.s32 32768, 32768
      %44 = vsyncadd [#allocation6], %s43
      %s45 = sshll.u32 [#allocation7], 4
      %s46 = int_to_ptr.vmem [resolvable:$true] %s45
      %51 = dma.hbm_to_vmem [thread:$0]  %s3, 32768, %s46, [#allocation6], 512, 512, 32
    $region17: #{tpu_custom_call.1} parent=1 // pred_fallthru
      _
    // Predicated region
    $region18: #{tpu_custom_call.1} parent=1 // pred_check
      _
    $region19: #{tpu_custom_call.1} parent=1 // pred_check_branch
      %53 = sbr.rel (0) target = $region21
    $region20: #{tpu_custom_call.1} parent=1 // pred_region
      _
    $region21: #{tpu_custom_call.1} parent=1 // pred_fallthru
      _
    // Predicated region
    $region22: #{tpu_custom_call.1} parent=1 // pred_check
      _
    $region23: #{tpu_custom_call.1} parent=1 // pred_check_branch
      %55 = sbr.rel (0) target = $region25
    $region24: #{tpu_custom_call.1} parent=1 // pred_region
      %s57 = ssub.s32 8192, 8192
      %58 = vsyncadd [#allocation9], %s57
      %s59 = sshll.u32 [#allocation8], 4
      %s60 = int_to_ptr.vmem [resolvable:$true] %s59
      %65 = dma.hbm_to_vmem [thread:$0]  %s5, 8192, %s60, [#allocation9], 128, 128, 8
    $region25: #{tpu_custom_call.1} parent=1 // pred_fallthru
      _
    // Predicated region
    $region26: #{tpu_custom_call.1} parent=1 // pred_check
      _
    $region27: #{tpu_custom_call.1} parent=1 // pred_check_branch
      %67 = sbr.rel (0) target = $region29
    $region28: #{tpu_custom_call.1} parent=1 // pred_region
      _
    $region29: #{tpu_custom_call.1} parent=1 // pred_fallthru
      _
    // Predicated region
    $region30: #{tpu_custom_call.1} parent=1 // pred_check
      _
    $region31: #{tpu_custom_call.1} parent=1 // pred_check_branch
      %69 = sbr.rel (0) target = $region33
    $region32: #{tpu_custom_call.1} parent=1 // pred_region
      %70 = dma.done [#allocation3], 128
    $region33: #{tpu_custom_call.1} parent=1 // pred_fallthru
      _
    // Predicated region
    $region34: #{tpu_custom_call.1} parent=1 // pred_check
      _
    $region35: #{tpu_custom_call.1} parent=1 // pred_check_branch
      %72 = sbr.rel (0) target = $region37
    $region36: #{tpu_custom_call.1} parent=1 // pred_region
      %73 = dma.done [#allocation6], 2048
    $region37: #{tpu_custom_call.1} parent=1 // pred_fallthru
      _
    // Predicated region
    $region38: #{tpu_custom_call.1} parent=1 // pred_check
      _
    $region39: #{tpu_custom_call.1} parent=1 // pred_check_branch
      %75 = sbr.rel (0) target = $region41
    $region40: #{tpu_custom_call.1} parent=1 // pred_region
      %76 = dma.done [#allocation6], 32768
    $region41: #{tpu_custom_call.1} parent=1 // pred_fallthru
      _
    // Predicated region
    $region42: #{tpu_custom_call.1} parent=1 // pred_check
      _
    $region43: #{tpu_custom_call.1} parent=1 // pred_check_branch
      %78 = sbr.rel (0) target = $region45
    $region44: #{tpu_custom_call.1} parent=1 // pred_region
      %79 = dma.done [#allocation9], 8192
    $region45: #{tpu_custom_call.1} parent=1 // pred_fallthru
      _
    %v80 = vld [vmem:[#allocation2] sm:$0xff]
    %v81 = vand.u32 2147483647, %v80
    %v82 = vadd.f32 %v81, 1.0
    %v83 = vrcp.pop %v82
    %v84 = vmul.f32 %v80, %v83
    %v85 = vld [vmem:[#allocation5] sm:$0xff]
    %v86 = vld [vmem:[#allocation5 + $0x8] sm:$0xff]
    %v87 = vld [vmem:[#allocation5 + $0x10] sm:$0xff]
    %v88 = vld [vmem:[#allocation5 + $0x18] sm:$0xff]
    %v89 = vld [vmem:[#allocation5 + $0x20] sm:$0xff]
    %v90 = vld [vmem:[#allocation5 + $0x28] sm:$0xff]
    %v91 = vld [vmem:[#allocation5 + $0x30] sm:$0xff]
    %v92 = vld [vmem:[#allocation5 + $0x38] sm:$0xff]
    %v93 = vld [vmem:[#allocation5 + $0x40] sm:$0xff]
    %v94 = vld [vmem:[#allocation5 + $0x48] sm:$0xff]
    %v95 = vld [vmem:[#allocation5 + $0x50] sm:$0xff]
    %v96 = vld [vmem:[#allocation5 + $0x58] sm:$0xff]
    %v97 = vld [vmem:[#allocation5 + $0x60] sm:$0xff]
    %v98 = vld [vmem:[#allocation5 + $0x68] sm:$0xff]
    %v99 = vld [vmem:[#allocation5 + $0x70] sm:$0xff]
    %v100 = vld [vmem:[#allocation5 + $0x78] sm:$0xff]
    %v101 = vld [vmem:[%s2] sm:$0xf]
    %v103 = vlaneseq
    %v104 = vshrl.u32 %v103, 7
    %v105 = vsub.s32 0, %v104
    %v106 = vrot.slane %v101, %v105
    %v107 = vlaneseq
    %v108 = vshrl.u32 %v107, 7
    %v109 = vsub.s32 1, %v108
    %v110 = vrot.slane %v101, %v109
    %v111 = vlaneseq
    %v112 = vshrl.u32 %v111, 7
    %v113 = vsub.s32 2, %v112
    %v114 = vrot.slane %v101, %v113
    %v115 = vlaneseq
    %v116 = vshrl.u32 %v115, 7
    %v117 = vsub.s32 3, %v116
    %v118 = vrot.slane %v101, %v117
    %vm123 = vcmask 261120
    %v125 = vsel %vm123, %v84, 0
    %127 = vmatprep.subr.mxu0 %v86
    %128 = vmatpush1.msra.mxu0 %v85
    %129 = vmatprep.subr.mxu0 %v90
    %130 = vmatpush1.msra.mxu0 %v89
    %131 = vmatprep.subr.mxu0 %v94
    %132 = vmatpush1.msra.mxu0 %v93
    %133 = vmatprep.subr.mxu0 %v98
    %134 = vmatpush1.msra.mxu0 %v97
    %135 = vmatprep.subr.mxu0 0.0
    %136 = vmatpush1.msra.mxu0 0.0
    %137 = vmatprep.subr.mxu0 0.0
    %138 = vmatpush1.msra.mxu0 0.0
    %139 = vmatprep.subr.mxu0 0.0
    %140 = vmatpush1.msra.mxu0 0.0
    %141 = vmatprep.subr.mxu0 0.0
    %142 = vmatpush1.msra.mxu0 0.0
    %143 = vmatprep.subr.mxu0 0.0
    %144 = vmatpush1.msra.mxu0 0.0
    %145 = vmatprep.subr.mxu0 0.0
    %146 = vmatpush1.msra.mxu0 0.0
    %147 = vmatprep.subr.mxu0 0.0
    %148 = vmatpush1.msra.mxu0 0.0
    %149 = vmatprep.subr.mxu0 0.0
    %150 = vmatpush1.msra.mxu0 0.0
    %151 = vmatprep.subr.mxu0 0.0
    %152 = vmatpush1.msra.mxu0 0.0
    %153 = vmatprep.subr.mxu0 0.0
    %154 = vmatpush1.msra.mxu0 0.0
    %155 = vmatprep.subr.mxu0 0.0
    %156 = vmatpush1.msra.mxu0 0.0
    %157 = vmatprep.subr.mxu0 0.0
    %158 = vmatpush1.msra.mxu0 0.0
    %159 = vmatprep.subr.mxu0 0.0
    %160 = vmatpush1.msra.mxu0 0.0
    %161 = vmatprep.subr.mxu0 0.0
    %162 = vmatpush1.msra.mxu0 0.0
    %163 = vmatprep.subr.mxu0 0.0
    %164 = vmatpush1.msra.mxu0 0.0
    %165 = vmatprep.subr.mxu0 0.0
    %166 = vmatpush1.msra.mxu0 0.0
    %167 = vmatprep.subr.mxu0 0.0
    %168 = vmatpush1.msra.mxu0 0.0
    %169 = vmatprep.subr.mxu0 0.0
    %170 = vmatpush1.msra.mxu0 0.0
    %171 = vmatprep.subr.mxu0 0.0
    %172 = vmatpush1.msra.mxu0 0.0
    %173 = vmatprep.subr.mxu0 0.0
    %174 = vmatpush1.msra.mxu0 0.0
    %175 = vmatprep.subr.mxu0 0.0
    %176 = vmatpush1.msra.mxu0 0.0
    %177 = vmatprep.subr.mxu0 0.0
    %178 = vmatpush1.msra.mxu0 0.0
    %179 = vmatprep.subr.mxu0 0.0
    %180 = vmatpush1.msra.mxu0 0.0
    %181 = vmatprep.subr.mxu0 0.0
    %182 = vmatpush1.msra.mxu0 0.0
    %183 = vmatprep.subr.mxu0 0.0
    %184 = vmatpush1.msra.mxu0 0.0
    %185 = vmatprep.subr.mxu0 0.0
    %186 = vmatpush1.msra.mxu0 0.0
    %187 = vmatprep.subr.mxu0 0.0
    %188 = vmatpush1.msra.mxu0 0.0
    %189 = vmatprep.subr.mxu0 0.0
    %190 = vmatpush1.msra.mxu0 0.0
    %191 = vmatprep.mubr.f32.mxu0 0.0
    %192 = vmatmul.mubr.f32.gmra.mrb[0].mxu0 %v125
    %v193 = vpop.f32.mrb[0].mxu0
    %v194 = vadd.f32 %v106, %v193
    %v195 = vpop.f32.mrb[0].mxu0
    %v196 = vadd.f32 %v110, %v195
    %197 = vdwg.mxu0
    %198 = vmatprep.subr.mxu0 %v88
    %199 = vmatpush1.msra.mxu0 %v87
    %200 = vmatprep.subr.mxu0 %v92
    %201 = vmatpush1.msra.mxu0 %v91
    %202 = vmatprep.subr.mxu0 %v96
    %203 = vmatpush1.msra.mxu0 %v95
    %204 = vmatprep.subr.mxu0 %v100
    %205 = vmatpush1.msra.mxu0 %v99
    %206 = vmatprep.subr.mxu0 0.0
    %207 = vmatpush1.msra.mxu0 0.0
    %208 = vmatprep.subr.mxu0 0.0
    %209 = vmatpush1.msra.mxu0 0.0
    %210 = vmatprep.subr.mxu0 0.0
    %211 = vmatpush1.msra.mxu0 0.0
    %212 = vmatprep.subr.mxu0 0.0
    %213 = vmatpush1.msra.mxu0 0.0
    %214 = vmatprep.subr.mxu0 0.0
    %215 = vmatpush1.msra.mxu0 0.0
    %216 = vmatprep.subr.mxu0 0.0
    %217 = vmatpush1.msra.mxu0 0.0
    %218 = vmatprep.subr.mxu0 0.0
    %219 = vmatpush1.msra.mxu0 0.0
    %220 = vmatprep.subr.mxu0 0.0
    %221 = vmatpush1.msra.mxu0 0.0
    %222 = vmatprep.subr.mxu0 0.0
    %223 = vmatpush1.msra.mxu0 0.0
    %224 = vmatprep.subr.mxu0 0.0
    %225 = vmatpush1.msra.mxu0 0.0
    %226 = vmatprep.subr.mxu0 0.0
    %227 = vmatpush1.msra.mxu0 0.0
    %228 = vmatprep.subr.mxu0 0.0
    %229 = vmatpush1.msra.mxu0 0.0
    %230 = vmatprep.subr.mxu0 0.0
    %231 = vmatpush1.msra.mxu0 0.0
    %232 = vmatprep.subr.mxu0 0.0
    %233 = vmatpush1.msra.mxu0 0.0
    %234 = vmatprep.subr.mxu0 0.0
    %235 = vmatpush1.msra.mxu0 0.0
    %236 = vmatprep.subr.mxu0 0.0
    %237 = vmatpush1.msra.mxu0 0.0
    %238 = vmatprep.subr.mxu0 0.0
    %239 = vmatpush1.msra.mxu0 0.0
    %240 = vmatprep.subr.mxu0 0.0
    %241 = vmatpush1.msra.mxu0 0.0
    %242 = vmatprep.subr.mxu0 0.0
    %243 = vmatpush1.msra.mxu0 0.0
    %244 = vmatprep.subr.mxu0 0.0
    %245 = vmatpush1.msra.mxu0 0.0
    %246 = vmatprep.subr.mxu0 0.0
    %247 = vmatpush1.msra.mxu0 0.0
    %248 = vmatprep.subr.mxu0 0.0
    %249 = vmatpush1.msra.mxu0 0.0
    %250 = vmatprep.subr.mxu0 0.0
    %251 = vmatpush1.msra.mxu0 0.0
    %252 = vmatprep.subr.mxu0 0.0
    %253 = vmatpush1.msra.mxu0 0.0
    %254 = vmatprep.subr.mxu0 0.0
    %255 = vmatpush1.msra.mxu0 0.0
    %256 = vmatprep.subr.mxu0 0.0
    %257 = vmatpush1.msra.mxu0 0.0
    %258 = vmatprep.subr.mxu0 0.0
    %259 = vmatpush1.msra.mxu0 0.0
    %260 = vmatprep.subr.mxu0 0.0
    %261 = vmatpush1.msra.mxu0 0.0
    %262 = vmatprep.mubr.f32.mxu0 0.0
    %263 = vmatmul.mubr.f32.gmra.mrb[0].mxu0 %v125
    %v264 = vpop.f32.mrb[0].mxu0
    %v265 = vadd.f32 %v114, %v264
    %v266 = vpop.f32.mrb[0].mxu0
    %v267 = vadd.f32 %v118, %v266
    %268 = vdwg.mxu0
    %v269 = vmax.f32 %v194, 0.0
    %v270 = vmax.f32 %v196, 0.0
    %v271 = vmax.f32 %v265, 0.0
    %v272 = vmax.f32 %v267, 0.0
    %v273 = vld [vmem:[#allocation7] sm:$0xff]
    %v274 = vld [vmem:[#allocation7 + $0x8] sm:$0xff]
    %v275 = vld [vmem:[#allocation7 + $0x10] sm:$0xff]
    %v276 = vld [vmem:[#allocation7 + $0x18] sm:$0xff]
    %v277 = vld [vmem:[#allocation7 + $0x20] sm:$0xff]
    %v278 = vld [vmem:[#allocation7 + $0x28] sm:$0xff]
    %v279 = vld [vmem:[#allocation7 + $0x30] sm:$0xff]
    %v280 = vld [vmem:[#allocation7 + $0x38] sm:$0xff]
    %v281 = vld [vmem:[#allocation7 + $0x40] sm:$0xff]
    %v282 = vld [vmem:[#allocation7 + $0x48] sm:$0xff]
    %v283 = vld [vmem:[#allocation7 + $0x50] sm:$0xff]
    %v284 = vld [vmem:[#allocation7 + $0x58] sm:$0xff]
    %v285 = vld [vmem:[#allocation7 + $0x60] sm:$0xff]
    %v286 = vld [vmem:[#allocation7 + $0x68] sm:$0xff]
    %v287 = vld [vmem:[#allocation7 + $0x70] sm:$0xff]
    %v288 = vld [vmem:[#allocation7 + $0x78] sm:$0xff]
    %v289 = vld [vmem:[#allocation7 + $0x80] sm:$0xff]
    %v290 = vld [vmem:[#allocation7 + $0x88] sm:$0xff]
    %v291 = vld [vmem:[#allocation7 + $0x90] sm:$0xff]
    %v292 = vld [vmem:[#allocation7 + $0x98] sm:$0xff]
    %v293 = vld [vmem:[#allocation7 + $0xa0] sm:$0xff]
    %v294 = vld [vmem:[#allocation7 + $0xa8] sm:$0xff]
    %v295 = vld [vmem:[#allocation7 + $0xb0] sm:$0xff]
    %v296 = vld [vmem:[#allocation7 + $0xb8] sm:$0xff]
    %v297 = vld [vmem:[#allocation7 + $0xc0] sm:$0xff]
    %v298 = vld [vmem:[#allocation7 + $0xc8] sm:$0xff]
    %v299 = vld [vmem:[#allocation7 + $0xd0] sm:$0xff]
    %v300 = vld [vmem:[#allocation7 + $0xd8] sm:$0xff]
    %v301 = vld [vmem:[#allocation7 + $0xe0] sm:$0xff]
    %v302 = vld [vmem:[#allocation7 + $0xe8] sm:$0xff]
    %v303 = vld [vmem:[#allocation7 + $0xf0] sm:$0xff]
    %v304 = vld [vmem:[#allocation7 + $0xf8] sm:$0xff]
    %v305 = vld [vmem:[#allocation7 + $0x100] sm:$0xff]
    %v306 = vld [vmem:[#allocation7 + $0x108] sm:$0xff]
    %v307 = vld [vmem:[#allocation7 + $0x110] sm:$0xff]
    %v308 = vld [vmem:[#allocation7 + $0x118] sm:$0xff]
    %v309 = vld [vmem:[#allocation7 + $0x120] sm:$0xff]
    %v310 = vld [vmem:[#allocation7 + $0x128] sm:$0xff]
    %v311 = vld [vmem:[#allocation7 + $0x130] sm:$0xff]
    %v312 = vld [vmem:[#allocation7 + $0x138] sm:$0xff]
    %v313 = vld [vmem:[#allocation7 + $0x140] sm:$0xff]
    %v314 = vld [vmem:[#allocation7 + $0x148] sm:$0xff]
    %v315 = vld [vmem:[#allocation7 + $0x150] sm:$0xff]
    %v316 = vld [vmem:[#allocation7 + $0x158] sm:$0xff]
    %v317 = vld [vmem:[#allocation7 + $0x160] sm:$0xff]
    %v318 = vld [vmem:[#allocation7 + $0x168] sm:$0xff]
    %v319 = vld [vmem:[#allocation7 + $0x170] sm:$0xff]
    %v320 = vld [vmem:[#allocation7 + $0x178] sm:$0xff]
    %v321 = vld [vmem:[#allocation7 + $0x180] sm:$0xff]
    %v322 = vld [vmem:[#allocation7 + $0x188] sm:$0xff]
    %v323 = vld [vmem:[#allocation7 + $0x190] sm:$0xff]
    %v324 = vld [vmem:[#allocation7 + $0x198] sm:$0xff]
    %v325 = vld [vmem:[#allocation7 + $0x1a0] sm:$0xff]
    %v326 = vld [vmem:[#allocation7 + $0x1a8] sm:$0xff]
    %v327 = vld [vmem:[#allocation7 + $0x1b0] sm:$0xff]
    %v328 = vld [vmem:[#allocation7 + $0x1b8] sm:$0xff]
    %v329 = vld [vmem:[#allocation7 + $0x1c0] sm:$0xff]
    %v330 = vld [vmem:[#allocation7 + $0x1c8] sm:$0xff]
    %v331 = vld [vmem:[#allocation7 + $0x1d0] sm:$0xff]
    %v332 = vld [vmem:[#allocation7 + $0x1d8] sm:$0xff]
    %v333 = vld [vmem:[#allocation7 + $0x1e0] sm:$0xff]
    %v334 = vld [vmem:[#allocation7 + $0x1e8] sm:$0xff]
    %v335 = vld [vmem:[#allocation7 + $0x1f0] sm:$0xff]
    %v336 = vld [vmem:[#allocation7 + $0x1f8] sm:$0xff]
    %v337 = vld [vmem:[#allocation7 + $0x200] sm:$0xff]
    %v338 = vld [vmem:[#allocation7 + $0x208] sm:$0xff]
    %v339 = vld [vmem:[#allocation7 + $0x210] sm:$0xff]
    %v340 = vld [vmem:[#allocation7 + $0x218] sm:$0xff]
    %v341 = vld [vmem:[#allocation7 + $0x220] sm:$0xff]
    %v342 = vld [vmem:[#allocation7 + $0x228] sm:$0xff]
    %v343 = vld [vmem:[#allocation7 + $0x230] sm:$0xff]
    %v344 = vld [vmem:[#allocation7 + $0x238] sm:$0xff]
    %v345 = vld [vmem:[#allocation7 + $0x240] sm:$0xff]
    %v346 = vld [vmem:[#allocation7 + $0x248] sm:$0xff]
    %v347 = vld [vmem:[#allocation7 + $0x250] sm:$0xff]
    %v348 = vld [vmem:[#allocation7 + $0x258] sm:$0xff]
    %v349 = vld [vmem:[#allocation7 + $0x260] sm:$0xff]
    %v350 = vld [vmem:[#allocation7 + $0x268] sm:$0xff]
    %v351 = vld [vmem:[#allocation7 + $0x270] sm:$0xff]
    %v352 = vld [vmem:[#allocation7 + $0x278] sm:$0xff]
    %v353 = vld [vmem:[#allocation7 + $0x280] sm:$0xff]
    %v354 = vld [vmem:[#allocation7 + $0x288] sm:$0xff]
    %v355 = vld [vmem:[#allocation7 + $0x290] sm:$0xff]
    %v356 = vld [vmem:[#allocation7 + $0x298] sm:$0xff]
    %v357 = vld [vmem:[#allocation7 + $0x2a0] sm:$0xff]
    %v358 = vld [vmem:[#allocation7 + $0x2a8] sm:$0xff]
    %v359 = vld [vmem:[#allocation7 + $0x2b0] sm:$0xff]
    %v360 = vld [vmem:[#allocation7 + $0x2b8] sm:$0xff]
    %v361 = vld [vmem:[#allocation7 + $0x2c0] sm:$0xff]
    %v362 = vld [vmem:[#allocation7 + $0x2c8] sm:$0xff]
    %v363 = vld [vmem:[#allocation7 + $0x2d0] sm:$0xff]
    %v364 = vld [vmem:[#allocation7 + $0x2d8] sm:$0xff]
    %v365 = vld [vmem:[#allocation7 + $0x2e0] sm:$0xff]
    %v366 = vld [vmem:[#allocation7 + $0x2e8] sm:$0xff]
    %v367 = vld [vmem:[#allocation7 + $0x2f0] sm:$0xff]
    %v368 = vld [vmem:[#allocation7 + $0x2f8] sm:$0xff]
    %v369 = vld [vmem:[#allocation7 + $0x300] sm:$0xff]
    %v370 = vld [vmem:[#allocation7 + $0x308] sm:$0xff]
    %v371 = vld [vmem:[#allocation7 + $0x310] sm:$0xff]
    %v372 = vld [vmem:[#allocation7 + $0x318] sm:$0xff]
    %v373 = vld [vmem:[#allocation7 + $0x320] sm:$0xff]
    %v374 = vld [vmem:[#allocation7 + $0x328] sm:$0xff]
    %v375 = vld [vmem:[#allocation7 + $0x330] sm:$0xff]
    %v376 = vld [vmem:[#allocation7 + $0x338] sm:$0xff]
    %v377 = vld [vmem:[#allocation7 + $0x340] sm:$0xff]
    %v378 = vld [vmem:[#allocation7 + $0x348] sm:$0xff]
    %v379 = vld [vmem:[#allocation7 + $0x350] sm:$0xff]
    %v380 = vld [vmem:[#allocation7 + $0x358] sm:$0xff]
    %v381 = vld [vmem:[#allocation7 + $0x360] sm:$0xff]
    %v382 = vld [vmem:[#allocation7 + $0x368] sm:$0xff]
    %v383 = vld [vmem:[#allocation7 + $0x370] sm:$0xff]
    %v384 = vld [vmem:[#allocation7 + $0x378] sm:$0xff]
    %v385 = vld [vmem:[#allocation7 + $0x380] sm:$0xff]
    %v386 = vld [vmem:[#allocation7 + $0x388] sm:$0xff]
    %v387 = vld [vmem:[#allocation7 + $0x390] sm:$0xff]
    %v388 = vld [vmem:[#allocation7 + $0x398] sm:$0xff]
    %v389 = vld [vmem:[#allocation7 + $0x3a0] sm:$0xff]
    %v390 = vld [vmem:[#allocation7 + $0x3a8] sm:$0xff]
    %v391 = vld [vmem:[#allocation7 + $0x3b0] sm:$0xff]
    %v392 = vld [vmem:[#allocation7 + $0x3b8] sm:$0xff]
    %v393 = vld [vmem:[#allocation7 + $0x3c0] sm:$0xff]
    %v394 = vld [vmem:[#allocation7 + $0x3c8] sm:$0xff]
    %v395 = vld [vmem:[#allocation7 + $0x3d0] sm:$0xff]
    %v396 = vld [vmem:[#allocation7 + $0x3d8] sm:$0xff]
    %v397 = vld [vmem:[#allocation7 + $0x3e0] sm:$0xff]
    %v398 = vld [vmem:[#allocation7 + $0x3e8] sm:$0xff]
    %v399 = vld [vmem:[#allocation7 + $0x3f0] sm:$0xff]
    %v400 = vld [vmem:[#allocation7 + $0x3f8] sm:$0xff]
    %v401 = vld [vmem:[#allocation7 + $0x400] sm:$0xff]
    %v402 = vld [vmem:[#allocation7 + $0x408] sm:$0xff]
    %v403 = vld [vmem:[#allocation7 + $0x410] sm:$0xff]
    %v404 = vld [vmem:[#allocation7 + $0x418] sm:$0xff]
    %v405 = vld [vmem:[#allocation7 + $0x420] sm:$0xff]
    %v406 = vld [vmem:[#allocation7 + $0x428] sm:$0xff]
    %v407 = vld [vmem:[#allocation7 + $0x430] sm:$0xff]
    %v408 = vld [vmem:[#allocation7 + $0x438] sm:$0xff]
    %v409 = vld [vmem:[#allocation7 + $0x440] sm:$0xff]
    %v410 = vld [vmem:[#allocation7 + $0x448] sm:$0xff]
    %v411 = vld [vmem:[#allocation7 + $0x450] sm:$0xff]
    %v412 = vld [vmem:[#allocation7 + $0x458] sm:$0xff]
    %v413 = vld [vmem:[#allocation7 + $0x460] sm:$0xff]
    %v414 = vld [vmem:[#allocation7 + $0x468] sm:$0xff]
    %v415 = vld [vmem:[#allocation7 + $0x470] sm:$0xff]
    %v416 = vld [vmem:[#allocation7 + $0x478] sm:$0xff]
    %v417 = vld [vmem:[#allocation7 + $0x480] sm:$0xff]
    %v418 = vld [vmem:[#allocation7 + $0x488] sm:$0xff]
    %v419 = vld [vmem:[#allocation7 + $0x490] sm:$0xff]
    %v420 = vld [vmem:[#allocation7 + $0x498] sm:$0xff]
    %v421 = vld [vmem:[#allocation7 + $0x4a0] sm:$0xff]
    %v422 = vld [vmem:[#allocation7 + $0x4a8] sm:$0xff]
    %v423 = vld [vmem:[#allocation7 + $0x4b0] sm:$0xff]
    %v424 = vld [vmem:[#allocation7 + $0x4b8] sm:$0xff]
    %v425 = vld [vmem:[#allocation7 + $0x4c0] sm:$0xff]
    %v426 = vld [vmem:[#allocation7 + $0x4c8] sm:$0xff]
    %v427 = vld [vmem:[#allocation7 + $0x4d0] sm:$0xff]
    %v428 = vld [vmem:[#allocation7 + $0x4d8] sm:$0xff]
    %v429 = vld [vmem:[#allocation7 + $0x4e0] sm:$0xff]
    %v430 = vld [vmem:[#allocation7 + $0x4e8] sm:$0xff]
    %v431 = vld [vmem:[#allocation7 + $0x4f0] sm:$0xff]
    %v432 = vld [vmem:[#allocation7 + $0x4f8] sm:$0xff]
    %v433 = vld [vmem:[#allocation7 + $0x500] sm:$0xff]
    %v434 = vld [vmem:[#allocation7 + $0x508] sm:$0xff]
    %v435 = vld [vmem:[#allocation7 + $0x510] sm:$0xff]
    %v436 = vld [vmem:[#allocation7 + $0x518] sm:$0xff]
    %v437 = vld [vmem:[#allocation7 + $0x520] sm:$0xff]
    %v438 = vld [vmem:[#allocation7 + $0x528] sm:$0xff]
    %v439 = vld [vmem:[#allocation7 + $0x530] sm:$0xff]
    %v440 = vld [vmem:[#allocation7 + $0x538] sm:$0xff]
    %v441 = vld [vmem:[#allocation7 + $0x540] sm:$0xff]
    %v442 = vld [vmem:[#allocation7 + $0x548] sm:$0xff]
    %v443 = vld [vmem:[#allocation7 + $0x550] sm:$0xff]
    %v444 = vld [vmem:[#allocation7 + $0x558] sm:$0xff]
    %v445 = vld [vmem:[#allocation7 + $0x560] sm:$0xff]
    %v446 = vld [vmem:[#allocation7 + $0x568] sm:$0xff]
    %v447 = vld [vmem:[#allocation7 + $0x570] sm:$0xff]
    %v448 = vld [vmem:[#allocation7 + $0x578] sm:$0xff]
    %v449 = vld [vmem:[#allocation7 + $0x580] sm:$0xff]
    %v450 = vld [vmem:[#allocation7 + $0x588] sm:$0xff]
    %v451 = vld [vmem:[#allocation7 + $0x590] sm:$0xff]
    %v452 = vld [vmem:[#allocation7 + $0x598] sm:$0xff]
    %v453 = vld [vmem:[#allocation7 + $0x5a0] sm:$0xff]
    %v454 = vld [vmem:[#allocation7 + $0x5a8] sm:$0xff]
    %v455 = vld [vmem:[#allocation7 + $0x5b0] sm:$0xff]
    %v456 = vld [vmem:[#allocation7 + $0x5b8] sm:$0xff]
    %v457 = vld [vmem:[#allocation7 + $0x5c0] sm:$0xff]
    %v458 = vld [vmem:[#allocation7 + $0x5c8] sm:$0xff]
    %v459 = vld [vmem:[#allocation7 + $0x5d0] sm:$0xff]
    %v460 = vld [vmem:[#allocation7 + $0x5d8] sm:$0xff]
    %v461 = vld [vmem:[#allocation7 + $0x5e0] sm:$0xff]
    %v462 = vld [vmem:[#allocation7 + $0x5e8] sm:$0xff]
    %v463 = vld [vmem:[#allocation7 + $0x5f0] sm:$0xff]
    %v464 = vld [vmem:[#allocation7 + $0x5f8] sm:$0xff]
    %v465 = vld [vmem:[#allocation7 + $0x600] sm:$0xff]
    %v466 = vld [vmem:[#allocation7 + $0x608] sm:$0xff]
    %v467 = vld [vmem:[#allocation7 + $0x610] sm:$0xff]
    %v468 = vld [vmem:[#allocation7 + $0x618] sm:$0xff]
    %v469 = vld [vmem:[#allocation7 + $0x620] sm:$0xff]
    %v470 = vld [vmem:[#allocation7 + $0x628] sm:$0xff]
    %v471 = vld [vmem:[#allocation7 + $0x630] sm:$0xff]
    %v472 = vld [vmem:[#allocation7 + $0x638] sm:$0xff]
    %v473 = vld [vmem:[#allocation7 + $0x640] sm:$0xff]
    %v474 = vld [vmem:[#allocation7 + $0x648] sm:$0xff]
    %v475 = vld [vmem:[#allocation7 + $0x650] sm:$0xff]
    %v476 = vld [vmem:[#allocation7 + $0x658] sm:$0xff]
    %v477 = vld [vmem:[#allocation7 + $0x660] sm:$0xff]
    %v478 = vld [vmem:[#allocation7 + $0x668] sm:$0xff]
    %v479 = vld [vmem:[#allocation7 + $0x670] sm:$0xff]
    %v480 = vld [vmem:[#allocation7 + $0x678] sm:$0xff]
    %v481 = vld [vmem:[#allocation7 + $0x680] sm:$0xff]
    %v482 = vld [vmem:[#allocation7 + $0x688] sm:$0xff]
    %v483 = vld [vmem:[#allocation7 + $0x690] sm:$0xff]
    %v484 = vld [vmem:[#allocation7 + $0x698] sm:$0xff]
    %v485 = vld [vmem:[#allocation7 + $0x6a0] sm:$0xff]
    %v486 = vld [vmem:[#allocation7 + $0x6a8] sm:$0xff]
    %v487 = vld [vmem:[#allocation7 + $0x6b0] sm:$0xff]
    %v488 = vld [vmem:[#allocation7 + $0x6b8] sm:$0xff]
    %v489 = vld [vmem:[#allocation7 + $0x6c0] sm:$0xff]
    %v490 = vld [vmem:[#allocation7 + $0x6c8] sm:$0xff]
    %v491 = vld [vmem:[#allocation7 + $0x6d0] sm:$0xff]
    %v492 = vld [vmem:[#allocation7 + $0x6d8] sm:$0xff]
    %v493 = vld [vmem:[#allocation7 + $0x6e0] sm:$0xff]
    %v494 = vld [vmem:[#allocation7 + $0x6e8] sm:$0xff]
    %v495 = vld [vmem:[#allocation7 + $0x6f0] sm:$0xff]
    %v496 = vld [vmem:[#allocation7 + $0x6f8] sm:$0xff]
    %v497 = vld [vmem:[#allocation7 + $0x700] sm:$0xff]
    %v498 = vld [vmem:[#allocation7 + $0x708] sm:$0xff]
    %v499 = vld [vmem:[#allocation7 + $0x710] sm:$0xff]
    %v500 = vld [vmem:[#allocation7 + $0x718] sm:$0xff]
    %v501 = vld [vmem:[#allocation7 + $0x720] sm:$0xff]
    %v502 = vld [vmem:[#allocation7 + $0x728] sm:$0xff]
    %v503 = vld [vmem:[#allocation7 + $0x730] sm:$0xff]
    %v504 = vld [vmem:[#allocation7 + $0x738] sm:$0xff]
    %v505 = vld [vmem:[#allocation7 + $0x740] sm:$0xff]
    %v506 = vld [vmem:[#allocation7 + $0x748] sm:$0xff]
    %v507 = vld [vmem:[#allocation7 + $0x750] sm:$0xff]
    %v508 = vld [vmem:[#allocation7 + $0x758] sm:$0xff]
    %v509 = vld [vmem:[#allocation7 + $0x760] sm:$0xff]
    %v510 = vld [vmem:[#allocation7 + $0x768] sm:$0xff]
    %v511 = vld [vmem:[#allocation7 + $0x770] sm:$0xff]
    %v512 = vld [vmem:[#allocation7 + $0x778] sm:$0xff]
    %v513 = vld [vmem:[#allocation7 + $0x780] sm:$0xff]
    %v514 = vld [vmem:[#allocation7 + $0x788] sm:$0xff]
    %v515 = vld [vmem:[#allocation7 + $0x790] sm:$0xff]
    %v516 = vld [vmem:[#allocation7 + $0x798] sm:$0xff]
    %v517 = vld [vmem:[#allocation7 + $0x7a0] sm:$0xff]
    %v518 = vld [vmem:[#allocation7 + $0x7a8] sm:$0xff]
    %v519 = vld [vmem:[#allocation7 + $0x7b0] sm:$0xff]
    %v520 = vld [vmem:[#allocation7 + $0x7b8] sm:$0xff]
    %v521 = vld [vmem:[#allocation7 + $0x7c0] sm:$0xff]
    %v522 = vld [vmem:[#allocation7 + $0x7c8] sm:$0xff]
    %v523 = vld [vmem:[#allocation7 + $0x7d0] sm:$0xff]
    %v524 = vld [vmem:[#allocation7 + $0x7d8] sm:$0xff]
    %v525 = vld [vmem:[#allocation7 + $0x7e0] sm:$0xff]
    %v526 = vld [vmem:[#allocation7 + $0x7e8] sm:$0xff]
    %v527 = vld [vmem:[#allocation7 + $0x7f0] sm:$0xff]
    %v528 = vld [vmem:[#allocation7 + $0x7f8] sm:$0xff]
    %v529 = vld [vmem:[%s4] sm:$0xf]
    %v531 = vlaneseq
    %v532 = vshrl.u32 %v531, 7
    %v533 = vsub.s32 0, %v532
    %v534 = vrot.slane %v529, %v533
    %v535 = vlaneseq
    %v536 = vshrl.u32 %v535, 7
    %v537 = vsub.s32 1, %v536
    %v538 = vrot.slane %v529, %v537
    %v539 = vlaneseq
    %v540 = vshrl.u32 %v539, 7
    %v541 = vsub.s32 2, %v540
    %v542 = vrot.slane %v529, %v541
    %v543 = vlaneseq
    %v544 = vshrl.u32 %v543, 7
    %v545 = vsub.s32 3, %v544
    %v546 = vrot.slane %v529, %v545
    %551 = vmatprep.subr.mxu0 %v274
    %552 = vmatpush1.msra.mxu0 %v273
    %553 = vmatprep.subr.mxu0 %v278
    %554 = vmatpush1.msra.mxu0 %v277
    %555 = vmatprep.subr.mxu0 %v282
    %556 = vmatpush1.msra.mxu0 %v281
    %557 = vmatprep.subr.mxu0 %v286
    %558 = vmatpush1.msra.mxu0 %v285
    %559 = vmatprep.subr.mxu0 %v290
    %560 = vmatpush1.msra.mxu0 %v289
    %561 = vmatprep.subr.mxu0 %v294
    %562 = vmatpush1.msra.mxu0 %v293
    %563 = vmatprep.subr.mxu0 %v298
    %564 = vmatpush1.msra.mxu0 %v297
    %565 = vmatprep.subr.mxu0 %v302
    %566 = vmatpush1.msra.mxu0 %v301
    %567 = vmatprep.subr.mxu0 %v306
    %568 = vmatpush1.msra.mxu0 %v305
    %569 = vmatprep.subr.mxu0 %v310
    %570 = vmatpush1.msra.mxu0 %v309
    %571 = vmatprep.subr.mxu0 %v314
    %572 = vmatpush1.msra.mxu0 %v313
    %573 = vmatprep.subr.mxu0 %v318
    %574 = vmatpush1.msra.mxu0 %v317
    %575 = vmatprep.subr.mxu0 %v322
    %576 = vmatpush1.msra.mxu0 %v321
    %577 = vmatprep.subr.mxu0 %v326
    %578 = vmatpush1.msra.mxu0 %v325
    %579 = vmatprep.subr.mxu0 %v330
    %580 = vmatpush1.msra.mxu0 %v329
    %581 = vmatprep.subr.mxu0 %v334
    %582 = vmatpush1.msra.mxu0 %v333
    %583 = vmatprep.subr.mxu0 %v338
    %584 = vmatpush1.msra.mxu0 %v337
    %585 = vmatprep.subr.mxu0 %v342
    %586 = vmatpush1.msra.mxu0 %v341
    %587 = vmatprep.subr.mxu0 %v346
    %588 = vmatpush1.msra.mxu0 %v345
    %589 = vmatprep.subr.mxu0 %v350
    %590 = vmatpush1.msra.mxu0 %v349
    %591 = vmatprep.subr.mxu0 %v354
    %592 = vmatpush1.msra.mxu0 %v353
    %593 = vmatprep.subr.mxu0 %v358
    %594 = vmatpush1.msra.mxu0 %v357
    %595 = vmatprep.subr.mxu0 %v362
    %596 = vmatpush1.msra.mxu0 %v361
    %597 = vmatprep.subr.mxu0 %v366
    %598 = vmatpush1.msra.mxu0 %v365
    %599 = vmatprep.subr.mxu0 %v370
    %600 = vmatpush1.msra.mxu0 %v369
    %601 = vmatprep.subr.mxu0 %v374
    %602 = vmatpush1.msra.mxu0 %v373
    %603 = vmatprep.subr.mxu0 %v378
    %604 = vmatpush1.msra.mxu0 %v377
    %605 = vmatprep.subr.mxu0 %v382
    %606 = vmatpush1.msra.mxu0 %v381
    %607 = vmatprep.subr.mxu0 %v386
    %608 = vmatpush1.msra.mxu0 %v385
    %609 = vmatprep.subr.mxu0 %v390
    %610 = vmatpush1.msra.mxu0 %v389
    %611 = vmatprep.subr.mxu0 %v394
    %612 = vmatpush1.msra.mxu0 %v393
    %613 = vmatprep.subr.mxu0 %v398
    %614 = vmatpush1.msra.mxu0 %v397
    %615 = vmatprep.mubr.f32.mxu0 %v270
    %616 = vmatmul.mubr.f32.gmra.mrb[0].mxu0 %v269
    %v617 = vpop.f32.mrb[0].mxu0
    %v618 = vadd.f32 %v534, %v617
    %v619 = vpop.f32.mrb[0].mxu0
    %v620 = vadd.f32 %v538, %v619
    %621 = vdwg.mxu0
    %622 = vmatprep.subr.mxu0 %v402
    %623 = vmatpush1.msra.mxu0 %v401
    %624 = vmatprep.subr.mxu0 %v406
    %625 = vmatpush1.msra.mxu0 %v405
    %626 = vmatprep.subr.mxu0 %v410
    %627 = vmatpush1.msra.mxu0 %v409
    %628 = vmatprep.subr.mxu0 %v414
    %629 = vmatpush1.msra.mxu0 %v413
    %630 = vmatprep.subr.mxu0 %v418
    %631 = vmatpush1.msra.mxu0 %v417
    %632 = vmatprep.subr.mxu0 %v422
    %633 = vmatpush1.msra.mxu0 %v421
    %634 = vmatprep.subr.mxu0 %v426
    %635 = vmatpush1.msra.mxu0 %v425
    %636 = vmatprep.subr.mxu0 %v430
    %637 = vmatpush1.msra.mxu0 %v429
    %638 = vmatprep.subr.mxu0 %v434
    %639 = vmatpush1.msra.mxu0 %v433
    %640 = vmatprep.subr.mxu0 %v438
    %641 = vmatpush1.msra.mxu0 %v437
    %642 = vmatprep.subr.mxu0 %v442
    %643 = vmatpush1.msra.mxu0 %v441
    %644 = vmatprep.subr.mxu0 %v446
    %645 = vmatpush1.msra.mxu0 %v445
    %646 = vmatprep.subr.mxu0 %v450
    %647 = vmatpush1.msra.mxu0 %v449
    %648 = vmatprep.subr.mxu0 %v454
    %649 = vmatpush1.msra.mxu0 %v453
    %650 = vmatprep.subr.mxu0 %v458
    %651 = vmatpush1.msra.mxu0 %v457
    %652 = vmatprep.subr.mxu0 %v462
    %653 = vmatpush1.msra.mxu0 %v461
    %654 = vmatprep.subr.mxu0 %v466
    %655 = vmatpush1.msra.mxu0 %v465
    %656 = vmatprep.subr.mxu0 %v470
    %657 = vmatpush1.msra.mxu0 %v469
    %658 = vmatprep.subr.mxu0 %v474
    %659 = vmatpush1.msra.mxu0 %v473
    %660 = vmatprep.subr.mxu0 %v478
    %661 = vmatpush1.msra.mxu0 %v477
    %662 = vmatprep.subr.mxu0 %v482
    %663 = vmatpush1.msra.mxu0 %v481
    %664 = vmatprep.subr.mxu0 %v486
    %665 = vmatpush1.msra.mxu0 %v485
    %666 = vmatprep.subr.mxu0 %v490
    %667 = vmatpush1.msra.mxu0 %v489
    %668 = vmatprep.subr.mxu0 %v494
    %669 = vmatpush1.msra.mxu0 %v493
    %670 = vmatprep.subr.mxu0 %v498
    %671 = vmatpush1.msra.mxu0 %v497
    %672 = vmatprep.subr.mxu0 %v502
    %673 = vmatpush1.msra.mxu0 %v501
    %674 = vmatprep.subr.mxu0 %v506
    %675 = vmatpush1.msra.mxu0 %v505
    %676 = vmatprep.subr.mxu0 %v510
    %677 = vmatpush1.msra.mxu0 %v509
    %678 = vmatprep.subr.mxu0 %v514
    %679 = vmatpush1.msra.mxu0 %v513
    %680 = vmatprep.subr.mxu0 %v518
    %681 = vmatpush1.msra.mxu0 %v517
    %682 = vmatprep.subr.mxu0 %v522
    %683 = vmatpush1.msra.mxu0 %v521
    %684 = vmatprep.subr.mxu0 %v526
    %685 = vmatpush1.msra.mxu0 %v525
    %686 = vmatprep.mubr.f32.mxu0 %v272
    %687 = vmatmul.mubr.f32.gmra.mrb[0].mxu0 %v271
    %v688 = vpop.f32.mrb[0].mxu0
    %v689 = vadd.f32 %v618, %v688
    %v690 = vpop.f32.mrb[0].mxu0
    %v691 = vadd.f32 %v620, %v690
    %692 = vdwg.mxu0
    %693 = vmatprep.subr.mxu0 %v276
    %694 = vmatpush1.msra.mxu0 %v275
    %695 = vmatprep.subr.mxu0 %v280
    %696 = vmatpush1.msra.mxu0 %v279
    %697 = vmatprep.subr.mxu0 %v284
    %698 = vmatpush1.msra.mxu0 %v283
    %699 = vmatprep.subr.mxu0 %v288
    %700 = vmatpush1.msra.mxu0 %v287
    %701 = vmatprep.subr.mxu0 %v292
    %702 = vmatpush1.msra.mxu0 %v291
    %703 = vmatprep.subr.mxu0 %v296
    %704 = vmatpush1.msra.mxu0 %v295
    %705 = vmatprep.subr.mxu0 %v300
    %706 = vmatpush1.msra.mxu0 %v299
    %707 = vmatprep.subr.mxu0 %v304
    %708 = vmatpush1.msra.mxu0 %v303
    %709 = vmatprep.subr.mxu0 %v308
    %710 = vmatpush1.msra.mxu0 %v307
    %711 = vmatprep.subr.mxu0 %v312
    %712 = vmatpush1.msra.mxu0 %v311
    %713 = vmatprep.subr.mxu0 %v316
    %714 = vmatpush1.msra.mxu0 %v315
    %715 = vmatprep.subr.mxu0 %v320
    %716 = vmatpush1.msra.mxu0 %v319
    %717 = vmatprep.subr.mxu0 %v324
    %718 = vmatpush1.msra.mxu0 %v323
    %719 = vmatprep.subr.mxu0 %v328
    %720 = vmatpush1.msra.mxu0 %v327
    %721 = vmatprep.subr.mxu0 %v332
    %722 = vmatpush1.msra.mxu0 %v331
    %723 = vmatprep.subr.mxu0 %v336
    %724 = vmatpush1.msra.mxu0 %v335
    %725 = vmatprep.subr.mxu0 %v340
    %726 = vmatpush1.msra.mxu0 %v339
    %727 = vmatprep.subr.mxu0 %v344
    %728 = vmatpush1.msra.mxu0 %v343
    %729 = vmatprep.subr.mxu0 %v348
    %730 = vmatpush1.msra.mxu0 %v347
    %731 = vmatprep.subr.mxu0 %v352
    %732 = vmatpush1.msra.mxu0 %v351
    %733 = vmatprep.subr.mxu0 %v356
    %734 = vmatpush1.msra.mxu0 %v355
    %735 = vmatprep.subr.mxu0 %v360
    %736 = vmatpush1.msra.mxu0 %v359
    %737 = vmatprep.subr.mxu0 %v364
    %738 = vmatpush1.msra.mxu0 %v363
    %739 = vmatprep.subr.mxu0 %v368
    %740 = vmatpush1.msra.mxu0 %v367
    %741 = vmatprep.subr.mxu0 %v372
    %742 = vmatpush1.msra.mxu0 %v371
    %743 = vmatprep.subr.mxu0 %v376
    %744 = vmatpush1.msra.mxu0 %v375
    %745 = vmatprep.subr.mxu0 %v380
    %746 = vmatpush1.msra.mxu0 %v379
    %747 = vmatprep.subr.mxu0 %v384
    %748 = vmatpush1.msra.mxu0 %v383
    %749 = vmatprep.subr.mxu0 %v388
    %750 = vmatpush1.msra.mxu0 %v387
    %751 = vmatprep.subr.mxu0 %v392
    %752 = vmatpush1.msra.mxu0 %v391
    %753 = vmatprep.subr.mxu0 %v396
    %754 = vmatpush1.msra.mxu0 %v395
    %755 = vmatprep.subr.mxu0 %v400
    %756 = vmatpush1.msra.mxu0 %v399
    %757 = vmatprep.mubr.f32.mxu0 %v270
    %758 = vmatmul.mubr.f32.gmra.mrb[0].mxu0 %v269
    %v759 = vpop.f32.mrb[0].mxu0
    %v760 = vadd.f32 %v542, %v759
    %v761 = vpop.f32.mrb[0].mxu0
    %v762 = vadd.f32 %v546, %v761
    %763 = vdwg.mxu0
    %764 = vmatprep.subr.mxu0 %v404
    %765 = vmatpush1.msra.mxu0 %v403
    %766 = vmatprep.subr.mxu0 %v408
    %767 = vmatpush1.msra.mxu0 %v407
    %768 = vmatprep.subr.mxu0 %v412
    %769 = vmatpush1.msra.mxu0 %v411
    %770 = vmatprep.subr.mxu0 %v416
    %771 = vmatpush1.msra.mxu0 %v415
    %772 = vmatprep.subr.mxu0 %v420
    %773 = vmatpush1.msra.mxu0 %v419
    %774 = vmatprep.subr.mxu0 %v424
    %775 = vmatpush1.msra.mxu0 %v423
    %776 = vmatprep.subr.mxu0 %v428
    %777 = vmatpush1.msra.mxu0 %v427
    %778 = vmatprep.subr.mxu0 %v432
    %779 = vmatpush1.msra.mxu0 %v431
    %780 = vmatprep.subr.mxu0 %v436
    %781 = vmatpush1.msra.mxu0 %v435
    %782 = vmatprep.subr.mxu0 %v440
    %783 = vmatpush1.msra.mxu0 %v439
    %784 = vmatprep.subr.mxu0 %v444
    %785 = vmatpush1.msra.mxu0 %v443
    %786 = vmatprep.subr.mxu0 %v448
    %787 = vmatpush1.msra.mxu0 %v447
    %788 = vmatprep.subr.mxu0 %v452
    %789 = vmatpush1.msra.mxu0 %v451
    %790 = vmatprep.subr.mxu0 %v456
    %791 = vmatpush1.msra.mxu0 %v455
    %792 = vmatprep.subr.mxu0 %v460
    %793 = vmatpush1.msra.mxu0 %v459
    %794 = vmatprep.subr.mxu0 %v464
    %795 = vmatpush1.msra.mxu0 %v463
    %796 = vmatprep.subr.mxu0 %v468
    %797 = vmatpush1.msra.mxu0 %v467
    %798 = vmatprep.subr.mxu0 %v472
    %799 = vmatpush1.msra.mxu0 %v471
    %800 = vmatprep.subr.mxu0 %v476
    %801 = vmatpush1.msra.mxu0 %v475
    %802 = vmatprep.subr.mxu0 %v480
    %803 = vmatpush1.msra.mxu0 %v479
    %804 = vmatprep.subr.mxu0 %v484
    %805 = vmatpush1.msra.mxu0 %v483
    %806 = vmatprep.subr.mxu0 %v488
    %807 = vmatpush1.msra.mxu0 %v487
    %808 = vmatprep.subr.mxu0 %v492
    %809 = vmatpush1.msra.mxu0 %v491
    %810 = vmatprep.subr.mxu0 %v496
    %811 = vmatpush1.msra.mxu0 %v495
    %812 = vmatprep.subr.mxu0 %v500
    %813 = vmatpush1.msra.mxu0 %v499
    %814 = vmatprep.subr.mxu0 %v504
    %815 = vmatpush1.msra.mxu0 %v503
    %816 = vmatprep.subr.mxu0 %v508
    %817 = vmatpush1.msra.mxu0 %v507
    %818 = vmatprep.subr.mxu0 %v512
    %819 = vmatpush1.msra.mxu0 %v511
    %820 = vmatprep.subr.mxu0 %v516
    %821 = vmatpush1.msra.mxu0 %v515
    %822 = vmatprep.subr.mxu0 %v520
    %823 = vmatpush1.msra.mxu0 %v519
    %824 = vmatprep.subr.mxu0 %v524
    %825 = vmatpush1.msra.mxu0 %v523
    %826 = vmatprep.subr.mxu0 %v528
    %827 = vmatpush1.msra.mxu0 %v527
    %828 = vmatprep.mubr.f32.mxu0 %v272
    %829 = vmatmul.mubr.f32.gmra.mrb[0].mxu0 %v271
    %v830 = vpop.f32.mrb[0].mxu0
    %v831 = vadd.f32 %v760, %v830
    %v832 = vpop.f32.mrb[0].mxu0
    %v833 = vadd.f32 %v762, %v832
    %834 = vdwg.mxu0
    %v835 = vmax.f32 %v689, 0.0
    %v836 = vmax.f32 %v691, 0.0
    %v837 = vmax.f32 %v831, 0.0
    %v838 = vmax.f32 %v833, 0.0
    %v839 = vld [vmem:[#allocation8] sm:$0xff]
    %v840 = vld [vmem:[#allocation8 + $0x8] sm:$0xff]
    %v841 = vld [vmem:[#allocation8 + $0x10] sm:$0xff]
    %v842 = vld [vmem:[#allocation8 + $0x18] sm:$0xff]
    %v843 = vld [vmem:[#allocation8 + $0x20] sm:$0xff]
    %v844 = vld [vmem:[#allocation8 + $0x28] sm:$0xff]
    %v845 = vld [vmem:[#allocation8 + $0x30] sm:$0xff]
    %v846 = vld [vmem:[#allocation8 + $0x38] sm:$0xff]
    %v847 = vld [vmem:[#allocation8 + $0x40] sm:$0xff]
    %v848 = vld [vmem:[#allocation8 + $0x48] sm:$0xff]
    %v849 = vld [vmem:[#allocation8 + $0x50] sm:$0xff]
    %v850 = vld [vmem:[#allocation8 + $0x58] sm:$0xff]
    %v851 = vld [vmem:[#allocation8 + $0x60] sm:$0xff]
    %v852 = vld [vmem:[#allocation8 + $0x68] sm:$0xff]
    %v853 = vld [vmem:[#allocation8 + $0x70] sm:$0xff]
    %v854 = vld [vmem:[#allocation8 + $0x78] sm:$0xff]
    %v855 = vld [vmem:[#allocation8 + $0x80] sm:$0xff]
    %v856 = vld [vmem:[#allocation8 + $0x88] sm:$0xff]
    %v857 = vld [vmem:[#allocation8 + $0x90] sm:$0xff]
    %v858 = vld [vmem:[#allocation8 + $0x98] sm:$0xff]
    %v859 = vld [vmem:[#allocation8 + $0xa0] sm:$0xff]
    %v860 = vld [vmem:[#allocation8 + $0xa8] sm:$0xff]
    %v861 = vld [vmem:[#allocation8 + $0xb0] sm:$0xff]
    %v862 = vld [vmem:[#allocation8 + $0xb8] sm:$0xff]
    %v863 = vld [vmem:[#allocation8 + $0xc0] sm:$0xff]
    %v864 = vld [vmem:[#allocation8 + $0xc8] sm:$0xff]
    %v865 = vld [vmem:[#allocation8 + $0xd0] sm:$0xff]
    %v866 = vld [vmem:[#allocation8 + $0xd8] sm:$0xff]
    %v867 = vld [vmem:[#allocation8 + $0xe0] sm:$0xff]
    %v868 = vld [vmem:[#allocation8 + $0xe8] sm:$0xff]
    %v869 = vld [vmem:[#allocation8 + $0xf0] sm:$0xff]
    %v870 = vld [vmem:[#allocation8 + $0xf8] sm:$0xff]
    %v871 = vld [vmem:[#allocation8 + $0x100] sm:$0xff]
    %v872 = vld [vmem:[#allocation8 + $0x108] sm:$0xff]
    %v873 = vld [vmem:[#allocation8 + $0x110] sm:$0xff]
    %v874 = vld [vmem:[#allocation8 + $0x118] sm:$0xff]
    %v875 = vld [vmem:[#allocation8 + $0x120] sm:$0xff]
    %v876 = vld [vmem:[#allocation8 + $0x128] sm:$0xff]
    %v877 = vld [vmem:[#allocation8 + $0x130] sm:$0xff]
    %v878 = vld [vmem:[#allocation8 + $0x138] sm:$0xff]
    %v879 = vld [vmem:[#allocation8 + $0x140] sm:$0xff]
    %v880 = vld [vmem:[#allocation8 + $0x148] sm:$0xff]
    %v881 = vld [vmem:[#allocation8 + $0x150] sm:$0xff]
    %v882 = vld [vmem:[#allocation8 + $0x158] sm:$0xff]
    %v883 = vld [vmem:[#allocation8 + $0x160] sm:$0xff]
    %v884 = vld [vmem:[#allocation8 + $0x168] sm:$0xff]
    %v885 = vld [vmem:[#allocation8 + $0x170] sm:$0xff]
    %v886 = vld [vmem:[#allocation8 + $0x178] sm:$0xff]
    %v887 = vld [vmem:[#allocation8 + $0x180] sm:$0xff]
    %v888 = vld [vmem:[#allocation8 + $0x188] sm:$0xff]
    %v889 = vld [vmem:[#allocation8 + $0x190] sm:$0xff]
    %v890 = vld [vmem:[#allocation8 + $0x198] sm:$0xff]
    %v891 = vld [vmem:[#allocation8 + $0x1a0] sm:$0xff]
    %v892 = vld [vmem:[#allocation8 + $0x1a8] sm:$0xff]
    %v893 = vld [vmem:[#allocation8 + $0x1b0] sm:$0xff]
    %v894 = vld [vmem:[#allocation8 + $0x1b8] sm:$0xff]
    %v895 = vld [vmem:[#allocation8 + $0x1c0] sm:$0xff]
    %v896 = vld [vmem:[#allocation8 + $0x1c8] sm:$0xff]
    %v897 = vld [vmem:[#allocation8 + $0x1d0] sm:$0xff]
    %v898 = vld [vmem:[#allocation8 + $0x1d8] sm:$0xff]
    %v899 = vld [vmem:[#allocation8 + $0x1e0] sm:$0xff]
    %v900 = vld [vmem:[#allocation8 + $0x1e8] sm:$0xff]
    %v901 = vld [vmem:[#allocation8 + $0x1f0] sm:$0xff]
    %v902 = vld [vmem:[#allocation8 + $0x1f8] sm:$0xff]
    %v903 = vld [vmem:[%s6] sm:$0x1]
    %v905 = vlaneseq
    %v906 = vshrl.u32 %v905, 7
    %v907 = vsub.s32 0, %v906
    %v908 = vrot.slane %v903, %v907
    %910 = vmatprep.subr.mxu0 0.0
    %911 = vmatpush1.msra.mxu0 %v839
    %912 = vmatprep.subr.mxu0 0.0
    %913 = vmatpush1.msra.mxu0 %v840
    %914 = vmatprep.subr.mxu0 0.0
    %915 = vmatpush1.msra.mxu0 %v841
    %916 = vmatprep.subr.mxu0 0.0
    %917 = vmatpush1.msra.mxu0 %v842
    %918 = vmatprep.subr.mxu0 0.0
    %919 = vmatpush1.msra.mxu0 %v843
    %920 = vmatprep.subr.mxu0 0.0
    %921 = vmatpush1.msra.mxu0 %v844
    %922 = vmatprep.subr.mxu0 0.0
    %923 = vmatpush1.msra.mxu0 %v845
    %924 = vmatprep.subr.mxu0 0.0
    %925 = vmatpush1.msra.mxu0 %v846
    %926 = vmatprep.subr.mxu0 0.0
    %927 = vmatpush1.msra.mxu0 %v847
    %928 = vmatprep.subr.mxu0 0.0
    %929 = vmatpush1.msra.mxu0 %v848
    %930 = vmatprep.subr.mxu0 0.0
    %931 = vmatpush1.msra.mxu0 %v849
    %932 = vmatprep.subr.mxu0 0.0
    %933 = vmatpush1.msra.mxu0 %v850
    %934 = vmatprep.subr.mxu0 0.0
    %935 = vmatpush1.msra.mxu0 %v851
    %936 = vmatprep.subr.mxu0 0.0
    %937 = vmatpush1.msra.mxu0 %v852
    %938 = vmatprep.subr.mxu0 0.0
    %939 = vmatpush1.msra.mxu0 %v853
    %940 = vmatprep.subr.mxu0 0.0
    %941 = vmatpush1.msra.mxu0 %v854
    %942 = vmatprep.subr.mxu0 0.0
    %943 = vmatpush1.msra.mxu0 %v855
    %944 = vmatprep.subr.mxu0 0.0
    %945 = vmatpush1.msra.mxu0 %v856
    %946 = vmatprep.subr.mxu0 0.0
    %947 = vmatpush1.msra.mxu0 %v857
    %948 = vmatprep.subr.mxu0 0.0
    %949 = vmatpush1.msra.mxu0 %v858
    %950 = vmatprep.subr.mxu0 0.0
    %951 = vmatpush1.msra.mxu0 %v859
    %952 = vmatprep.subr.mxu0 0.0
    %953 = vmatpush1.msra.mxu0 %v860
    %954 = vmatprep.subr.mxu0 0.0
    %955 = vmatpush1.msra.mxu0 %v861
    %956 = vmatprep.subr.mxu0 0.0
    %957 = vmatpush1.msra.mxu0 %v862
    %958 = vmatprep.subr.mxu0 0.0
    %959 = vmatpush1.msra.mxu0 %v863
    %960 = vmatprep.subr.mxu0 0.0
    %961 = vmatpush1.msra.mxu0 %v864
    %962 = vmatprep.subr.mxu0 0.0
    %963 = vmatpush1.msra.mxu0 %v865
    %964 = vmatprep.subr.mxu0 0.0
    %965 = vmatpush1.msra.mxu0 %v866
    %966 = vmatprep.subr.mxu0 0.0
    %967 = vmatpush1.msra.mxu0 %v867
    %968 = vmatprep.subr.mxu0 0.0
    %969 = vmatpush1.msra.mxu0 %v868
    %970 = vmatprep.subr.mxu0 0.0
    %971 = vmatpush1.msra.mxu0 %v869
    %972 = vmatprep.subr.mxu0 0.0
    %973 = vmatpush1.msra.mxu0 %v870
    %974 = vmatprep.mubr.f32.mxu0 %v836
    %975 = vmatmul.mubr.f32.gmra.mrb[0].mxu0 %v835
    %v976 = vpop.f32.mrb[0].mxu0
    %v977 = vadd.f32 %v908, %v976
    %v978 = vpop.f32.mrb[0].mxu0
    %979 = vdwg.mxu0
    %980 = vmatprep.subr.mxu0 0.0
    %981 = vmatpush1.msra.mxu0 %v871
    %982 = vmatprep.subr.mxu0 0.0
    %983 = vmatpush1.msra.mxu0 %v872
    %984 = vmatprep.subr.mxu0 0.0
    %985 = vmatpush1.msra.mxu0 %v873
    %986 = vmatprep.subr.mxu0 0.0
    %987 = vmatpush1.msra.mxu0 %v874
    %988 = vmatprep.subr.mxu0 0.0
    %989 = vmatpush1.msra.mxu0 %v875
    %990 = vmatprep.subr.mxu0 0.0
    %991 = vmatpush1.msra.mxu0 %v876
    %992 = vmatprep.subr.mxu0 0.0
    %993 = vmatpush1.msra.mxu0 %v877
    %994 = vmatprep.subr.mxu0 0.0
    %995 = vmatpush1.msra.mxu0 %v878
    %996 = vmatprep.subr.mxu0 0.0
    %997 = vmatpush1.msra.mxu0 %v879
    %998 = vmatprep.subr.mxu0 0.0
    %999 = vmatpush1.msra.mxu0 %v880
    %1000 = vmatprep.subr.mxu0 0.0
    %1001 = vmatpush1.msra.mxu0 %v881
    %1002 = vmatprep.subr.mxu0 0.0
    %1003 = vmatpush1.msra.mxu0 %v882
    %1004 = vmatprep.subr.mxu0 0.0
    %1005 = vmatpush1.msra.mxu0 %v883
    %1006 = vmatprep.subr.mxu0 0.0
    %1007 = vmatpush1.msra.mxu0 %v884
    %1008 = vmatprep.subr.mxu0 0.0
    %1009 = vmatpush1.msra.mxu0 %v885
    %1010 = vmatprep.subr.mxu0 0.0
    %1011 = vmatpush1.msra.mxu0 %v886
    %1012 = vmatprep.subr.mxu0 0.0
    %1013 = vmatpush1.msra.mxu0 %v887
    %1014 = vmatprep.subr.mxu0 0.0
    %1015 = vmatpush1.msra.mxu0 %v888
    %1016 = vmatprep.subr.mxu0 0.0
    %1017 = vmatpush1.msra.mxu0 %v889
    %1018 = vmatprep.subr.mxu0 0.0
    %1019 = vmatpush1.msra.mxu0 %v890
    %1020 = vmatprep.subr.mxu0 0.0
    %1021 = vmatpush1.msra.mxu0 %v891
    %1022 = vmatprep.subr.mxu0 0.0
    %1023 = vmatpush1.msra.mxu0 %v892
    %1024 = vmatprep.subr.mxu0 0.0
    %1025 = vmatpush1.msra.mxu0 %v893
    %1026 = vmatprep.subr.mxu0 0.0
    %1027 = vmatpush1.msra.mxu0 %v894
    %1028 = vmatprep.subr.mxu0 0.0
    %1029 = vmatpush1.msra.mxu0 %v895
    %1030 = vmatprep.subr.mxu0 0.0
    %1031 = vmatpush1.msra.mxu0 %v896
    %1032 = vmatprep.subr.mxu0 0.0
    %1033 = vmatpush1.msra.mxu0 %v897
    %1034 = vmatprep.subr.mxu0 0.0
    %1035 = vmatpush1.msra.mxu0 %v898
    %1036 = vmatprep.subr.mxu0 0.0
    %1037 = vmatpush1.msra.mxu0 %v899
    %1038 = vmatprep.subr.mxu0 0.0
    %1039 = vmatpush1.msra.mxu0 %v900
    %1040 = vmatprep.subr.mxu0 0.0
    %1041 = vmatpush1.msra.mxu0 %v901
    %1042 = vmatprep.subr.mxu0 0.0
    %1043 = vmatpush1.msra.mxu0 %v902
    %1044 = vmatprep.mubr.f32.mxu0 %v838
    %1045 = vmatmul.mubr.f32.gmra.mrb[0].mxu0 %v837
    %v1046 = vpop.f32.mrb[0].mxu0
    %v1047 = vadd.f32 %v977, %v1046
    %v1048 = vpop.f32.mrb[0].mxu0
    %1049 = vdwg.mxu0
    %v1050 = vtanh.pop %v1047
    %1051 = vst [vmem:[#allocation10] sm:$0xff] %v1050
    // Predicated region
    $region46: #{tpu_custom_call.1} parent=1 // pred_check
      _
    $region47: #{tpu_custom_call.1} parent=1 // pred_check_branch
      %1053 = sbr.rel (0) target = $region49
    $region48: #{tpu_custom_call.1} parent=1 // pred_region
      %s1055 = ssub.s32 128, 128
      %1056 = vsyncadd [#allocation4], %s1055
      %s1058 = sshll.u32 [#allocation10], 4
      %s1059 = int_to_ptr.vmem [resolvable:$true] %s1058
      %1061 = dma.vmem_to_hbm [thread:$0]  %s1059, 128, %s7, [#allocation4]
    $region49: #{tpu_custom_call.1} parent=1 // pred_fallthru
      _
    // Predicated region
    $region50: #{tpu_custom_call.1} parent=1 // pred_check
      _
    $region51: #{tpu_custom_call.1} parent=1 // pred_check_branch
      %1063 = sbr.rel (0) target = $region53
    $region52: #{tpu_custom_call.1} parent=1 // pred_region
      %1064 = dma.done [#allocation4], 128
    $region53: #{tpu_custom_call.1} parent=1 // pred_fallthru
      _
    %1065 = vsyncpa [#allocation3], 1
    %1066 = vsyncpa [#allocation6], 1
    %1067 = vsyncpa [#allocation9], 1
    %1068 = vsyncpa [#allocation4], 1

</llo_original>
